<compile_context>
chip_gen: v5e
topology: v5e:2x2
jax: 0.10.0
libtpu: 0.0.40
codegen_flags: <defaults>
</compile_context>

<pallas_src>
import functools
import math

import jax
import jax.numpy as jnp
from jax.experimental import pallas as pl
from jax.experimental.pallas import tpu as pltpu


# ----------------------------- config helpers ------------------------------

def compute_hidden_dim(dim, multiple_of, ffn_dim_multiplier=None):
    hidden_dim = int(2 * (4 * dim) / 3)
    if ffn_dim_multiplier is not None:
        hidden_dim = int(ffn_dim_multiplier * hidden_dim)
    hidden_dim = multiple_of * ((hidden_dim + multiple_of - 1) // multiple_of)
    return hidden_dim


def _rmsnorm(v, w, eps):
    var = jnp.mean(v * v, axis=-1, keepdims=True)
    return v * jax.lax.rsqrt(var + eps) * w


def _resident_spec(shape):
    # Full-array block, constant (0,...,0) index map (weight stays resident).
    zeros = (0,) * len(shape)
    return pl.BlockSpec(shape, lambda *args, _z=zeros: _z)


# ------------------------------ Pallas kernels ------------------------------

def qkv_proj_kernel(x_ref, rms1_ref, wqkv_ref, q_ref, k_ref, v_ref,
                    *, n_heads, n_kv_heads, head_dim, eps):
    f32, bf16 = jnp.float32, jnp.bfloat16
    x = x_ref[...]                                           # (S, D) f32
    nx = _rmsnorm(x, rms1_ref[...], eps)
    # One fused QKV projection (bf16 MXU, f32 accumulation).
    qkv = jnp.dot(nx.astype(bf16), wqkv_ref[...],
                  preferred_element_type=f32)                # (S, (H+2G)*hd)
    q_w = n_heads * head_dim
    kv_w = n_kv_heads * head_dim
    # Lane-tile-aligned static splits (all offsets multiples of 128).
    q_ref[...] = qkv[:, :q_w].astype(bf16)
    k_ref[...] = qkv[:, q_w:q_w + kv_w].astype(bf16)
    v_ref[...] = qkv[:, q_w + kv_w:].astype(bf16)


def attention_kernel(q_ref, k_ref, v_ref, cq_ref, sq_ref, ck_ref, sk_ref,
                     o_ref, *, start_pos, q_tile):
    f32, bf16 = jnp.float32, jnp.bfloat16
    qi = pl.program_id(2)
    hd = q_ref.shape[-1]
    hh = hd // 2
    s_kv = k_ref.shape[0]

    q = q_ref[...].astype(f32)                               # (tq, hd)
    k = k_ref[...].astype(f32)                               # (S,  hd)

    # Half-split RoPE via an XLU lane roll; sin tables have the sign baked in
    # (first half = -sin, second half = +sin), cos tables are full width.
    qr = q * cq_ref[...] + pltpu.roll(q, hh, 1) * sq_ref[...]
    kr = k * ck_ref[...] + pltpu.roll(k, hh, 1) * sk_ref[...]

    # 1/sqrt(head_dim) is folded into wq at init -- no score scaling here.
    scores = jnp.einsum('qd,kd->qk', qr.astype(bf16), kr.astype(bf16),
                        preferred_element_type=f32)          # (tq, S)

    # In-kernel causal mask (no (S,S) mask DMA).
    row = qi * q_tile + jax.lax.broadcasted_iota(jnp.int32, (q_tile, s_kv), 0)
    col = jax.lax.broadcasted_iota(jnp.int32, (q_tile, s_kv), 1)
    scores = jnp.where(col > row + start_pos, jnp.float32(-1e30), scores)

    m = jnp.max(scores, axis=-1, keepdims=True)
    p = jnp.exp(scores - m)
    l = jnp.sum(p, axis=-1, keepdims=True)
    ctx = jnp.einsum('qk,kd->qd', p.astype(bf16), v_ref[...],
                     preferred_element_type=f32)             # (tq, hd)
    # Denominator applied after the PV matmul (S/hd x fewer VPU multiplies).
    ctx = ctx * pl.reciprocal(l, approx=True)
    o_ref[...] = ctx.astype(o_ref.dtype)


def ffn_block_kernel(x_ref, ctx_ref, wo_ref, rms2_ref, wgu_ref, wd_ref,
                     o_ref, *, hidden_dim, eps):
    f32, bf16 = jnp.float32, jnp.bfloat16
    x = x_ref[...]                                           # (S, D) f32
    attn_out = jnp.dot(ctx_ref[...], wo_ref[...],
                       preferred_element_type=f32)           # (S, D)
    h1 = x + attn_out
    nh = _rmsnorm(h1, rms2_ref[...], eps)
    gu = jnp.dot(nh.astype(bf16), wgu_ref[...],
                 preferred_element_type=f32)                 # (S, 2*HID)
    g = gu[:, :hidden_dim]
    u = gu[:, hidden_dim:]
    act = jax.nn.silu(g) * u
    ffn = jnp.dot(act.astype(bf16), wd_ref[...],
                  preferred_element_type=f32)                # (S, D)
    o_ref[...] = (h1 + ffn).astype(o_ref.dtype)


def final_head_kernel(h_ref, wn_ref, lm_ref, o_ref, *, eps):
    n = _rmsnorm(h_ref[...], wn_ref[...], eps)
    o_ref[...] = jnp.dot(n.astype(jnp.bfloat16), lm_ref[...],
                         preferred_element_type=jnp.float32)


# ------------------------------ JAX wrappers --------------------------------

def run_qkv_proj(x, layer_p, cfg):
    B, S, D = x.shape
    H, G, hd = cfg["n_heads"], cfg["n_kv_heads"], cfg["head_dim"]
    kernel = functools.partial(qkv_proj_kernel, n_heads=H, n_kv_heads=G,
                               head_dim=hd, eps=cfg["norm_eps"])
    return pl.pallas_call(
        kernel,
        out_shape=(jax.ShapeDtypeStruct((B, S, H * hd), jnp.bfloat16),
                   jax.ShapeDtypeStruct((B, S, G * hd), jnp.bfloat16),
                   jax.ShapeDtypeStruct((B, S, G * hd), jnp.bfloat16)),
        grid=(B,),
        in_specs=[pl.BlockSpec((None, S, D), lambda b: (b, 0, 0)),
                  _resident_spec(layer_p["rms1"].shape),
                  _resident_spec(layer_p["wqkv"].shape)],
        out_specs=(pl.BlockSpec((None, S, H * hd), lambda b: (b, 0, 0)),
                   pl.BlockSpec((None, S, G * hd), lambda b: (b, 0, 0)),
                   pl.BlockSpec((None, S, G * hd), lambda b: (b, 0, 0))),
        compiler_params=pltpu.CompilerParams(dimension_semantics=("parallel",)),
    )(x, layer_p["rms1"], layer_p["wqkv"])


def run_attention(q, k, v, cos, sin_signed, start_pos, cfg):
    B, S, _ = q.shape
    H, G, hd = cfg["n_heads"], cfg["n_kv_heads"], cfg["head_dim"]
    n_rep = H // G
    # Query tile (parallel grid axis); largest aligned divisor of S.
    tq = S
    for cand in (128, 64, 32, 16, 8):
        if S % cand == 0:
            tq = cand
            break
    kernel = functools.partial(attention_kernel, start_pos=start_pos, q_tile=tq)
    return pl.pallas_call(
        kernel,
        out_shape=jax.ShapeDtypeStruct((B, S, H * hd), jnp.bfloat16),
        grid=(B, H, S // tq),
        in_specs=[
            pl.BlockSpec((None, tq, hd), lambda b, h, i: (b, i, h)),
            # GQA in the index_map only -- K/V are never repeated in memory.
            pl.BlockSpec((None, S, hd), lambda b, h, i: (b, 0, h // n_rep)),
            pl.BlockSpec((None, S, hd), lambda b, h, i: (b, 0, h // n_rep)),
            pl.BlockSpec((tq, hd), lambda b, h, i: (i, 0)),   # cos for q tile
            pl.BlockSpec((tq, hd), lambda b, h, i: (i, 0)),   # sin for q tile
            pl.BlockSpec((S, hd), lambda b, h, i: (0, 0)),    # cos for keys
            pl.BlockSpec((S, hd), lambda b, h, i: (0, 0)),    # sin for keys
        ],
        out_specs=pl.BlockSpec((None, tq, hd), lambda b, h, i: (b, i, h)),
        compiler_params=pltpu.CompilerParams(
            dimension_semantics=("parallel", "parallel", "parallel")),
    )(q, k, v, cos, sin_signed, cos, sin_signed)


def run_ffn_block(x, ctx, layer_p, cfg):
    B, S, D = x.shape
    kernel = functools.partial(ffn_block_kernel, hidden_dim=cfg["hidden_dim"],
                               eps=cfg["norm_eps"])
    weights = (layer_p["wo"], layer_p["rms2"], layer_p["wgu"], layer_p["wd"])
    in_specs = [pl.BlockSpec((None, S, D), lambda b: (b, 0, 0)),
                pl.BlockSpec((None, S, ctx.shape[-1]), lambda b: (b, 0, 0))]
    in_specs += [_resident_spec(w.shape) for w in weights]
    return pl.pallas_call(
        kernel,
        out_shape=jax.ShapeDtypeStruct((B, S, D), jnp.float32),
        grid=(B,),
        in_specs=in_specs,
        out_specs=pl.BlockSpec((None, S, D), lambda b: (b, 0, 0)),
        compiler_params=pltpu.CompilerParams(dimension_semantics=("parallel",)),
    )(x, ctx, *weights)


def run_final_head(h, norm_w, lm_w, cfg):
    B, S, D = h.shape
    V = lm_w.shape[1]
    tV = V                      # lane-dense vocab tile, capped at 1024
    for cand in (1024, 512, 256, 128):
        if V % cand == 0:
            tV = cand
            break
    kernel = functools.partial(final_head_kernel, eps=cfg["norm_eps"])
    # Grid (V/tV, B): batch is the INNER axis, so each lm_head weight tile
    # stays resident across the batch instead of being re-streamed.
    return pl.pallas_call(
        kernel,
        out_shape=jax.ShapeDtypeStruct((B, S, V), jnp.float32),
        grid=(V // tV, B),
        in_specs=[pl.BlockSpec((None, S, D), lambda vi, b: (b, 0, 0)),
                  pl.BlockSpec((1, D), lambda vi, b: (0, 0)),
                  pl.BlockSpec((D, tV), lambda vi, b: (0, vi))],
        out_specs=pl.BlockSpec((None, S, tV), lambda vi, b: (b, 0, vi)),
        compiler_params=pltpu.CompilerParams(
            dimension_semantics=("parallel", "arbitrary")),
    )(h, norm_w, lm_w)


def precompute_rope(head_dim, max_pos, start_pos, seqlen, theta=10000.0):
    freqs = 1.0 / (theta ** (jnp.arange(0, head_dim, 2, dtype=jnp.float32)
                             / head_dim))                    # (hd/2,)
    t = jnp.arange(max_pos, dtype=jnp.float32)
    angles = jnp.outer(t, freqs)[start_pos:start_pos + seqlen]   # (S, hd/2)
    cos = jnp.cos(angles)
    sin = jnp.sin(angles)
    # Full-width tables for the roll-based rotation:
    #   out = x * cos_full + roll(x, hd/2) * sin_signed
    cos_full = jnp.concatenate([cos, cos], axis=-1)          # (S, hd)
    sin_signed = jnp.concatenate([-sin, sin], axis=-1)       # (S, hd)
    return cos_full, sin_signed


def rope_head_permutation(n_heads_out, head_dim):
    # [0,2,4,...,1,3,5,...] within each head: interleaved -> half-split.
    perm = jnp.concatenate([jnp.arange(0, head_dim, 2),
                            jnp.arange(1, head_dim, 2)])
    return jnp.concatenate([perm + h * head_dim for h in range(n_heads_out)])


def transformer_forward(tokens, start_pos, params, cfg):
    B, S = tokens.shape
    assert S <= cfg["max_seq_len"]
    h = params["embed"][tokens]                              # (B, S, D) f32

    cos, sin_signed = precompute_rope(cfg["head_dim"], cfg["max_seq_len"] * 2,
                                      start_pos, S)

    # TODO(synk): KV cache carry for start_pos > 0 (decode against a
    # pre-filled cache) is not modeled; this matches the reference for a
    # fresh-cache prefill (start_pos == 0).
    for layer_p in params["layers"]:
        q, k, v = run_qkv_proj(h, layer_p, cfg)
        ctx = run_attention(q, k, v, cos, sin_signed, start_pos, cfg)
        h = run_ffn_block(h, ctx, layer_p, cfg)

    return run_final_head(h, params["norm"], params["lm_head"], cfg)


# ------------------------------ param init ----------------------------------

def init_params(key, cfg):
    D = cfg["dim"]
    H, G, hd = cfg["n_heads"], cfg["n_kv_heads"], cfg["head_dim"]
    HID = cfg["hidden_dim"]
    V = cfg["vocab_size"]
    perm_q = rope_head_permutation(H, hd)
    perm_kv = rope_head_permutation(G, hd)
    attn_scale = 1.0 / math.sqrt(hd)

    def dense(k, shape, scale=0.02):
        return jax.random.normal(k, shape, jnp.float32) * scale

    keys = jax.random.split(key, 2 + cfg["n_layers"])
    params = {"embed": dense(keys[0], (V, D)),
              "norm": jnp.ones((1, D), jnp.float32),
              "lm_head": dense(keys[1], (D, V)).astype(jnp.bfloat16),
              "layers": []}
    for li in range(cfg["n_layers"]):
        lk = jax.random.split(keys[2 + li], 7)
        # Weights pre-transposed to (in, out); RoPE interleave->half-split
        # permutation applied to q/k output columns; 1/sqrt(hd) folded into wq.
        wq = dense(lk[0], (D, H * hd))[:, perm_q] * attn_scale
        wk = dense(lk[1], (D, G * hd))[:, perm_kv]
        wv = dense(lk[2], (D, G * hd))
        wqkv = jnp.concatenate([wq, wk, wv], axis=1).astype(jnp.bfloat16)
        wo = dense(lk[3], (H * hd, D)).astype(jnp.bfloat16)
        wg = dense(lk[4], (D, HID))
        wu = dense(lk[5], (D, HID))
        wgu = jnp.concatenate([wg, wu], axis=1).astype(jnp.bfloat16)
        wd = dense(lk[6], (HID, D)).astype(jnp.bfloat16)
        params["layers"].append({
            "wqkv": wqkv, "wo": wo,
            "rms1": jnp.ones((1, D), jnp.float32),
            "rms2": jnp.ones((1, D), jnp.float32),
            "wgu": wgu, "wd": wd,
        })
    return params


# --------------------------------- main --------------------------------------

if __name__ == "__main__":
    cfg = dict(
        dim=256, n_layers=2, n_heads=2, n_kv_heads=1,
        vocab_size=512, max_seq_len=64, multiple_of=128, norm_eps=1e-5,
    )
    assert cfg["dim"] % cfg["n_heads"] == 0
    cfg["head_dim"] = cfg["dim"] // cfg["n_heads"]           # 128 (lane-aligned)
    cfg["hidden_dim"] = compute_hidden_dim(cfg["dim"], cfg["multiple_of"])  # 768

    key = jax.random.PRNGKey(0)
    pkey, tkey = jax.random.split(key)
    params = init_params(pkey, cfg)

    batch, seqlen, start_pos = 2, 16, 0
    tokens = jax.random.randint(tkey, (batch, seqlen), 0, cfg["vocab_size"],
                                dtype=jnp.int32)

    logits = transformer_forward(tokens, start_pos, params, cfg)
    logits = jax.block_until_ready(logits)
    assert logits.shape == (batch, seqlen, cfg["vocab_size"])
    assert logits.dtype == jnp.float32
    assert bool(jnp.all(jnp.isfinite(logits)))
    print("KERNEL_OK")
</pallas_src>

<mosaic_0001>
module attributes {stable_mosaic.version = 11 : i64} {
  func.func @qkv_proj_kernel(%arg0: i32, %arg1: memref<1x16x256xf32, #tpu.memory_space<vmem>>, %arg2: memref<1x256xf32, #tpu.memory_space<vmem>>, %arg3: memref<256x512xbf16, #tpu.memory_space<vmem>>, %arg4: memref<1x16x256xbf16, #tpu.memory_space<vmem>>, %arg5: memref<1x16x128xbf16, #tpu.memory_space<vmem>>, %arg6: memref<1x16x128xbf16, #tpu.memory_space<vmem>>) attributes {dimension_semantics = [#tpu.dimension_semantics<parallel>], iteration_bounds = array<i64: 2>, scalar_prefetch = 0 : i64, scratch_operands = 0 : i64, tpu.core_type = #tpu.core_type<tc>, window_params = [{transform_indices = @transform_0, window_bounds = array<i64: 1, 16, 256>}, {pipeline_mode = #tpu.pipeline_mode<synchronous>, transform_indices = @transform_1, window_bounds = array<i64: 1, 256>}, {pipeline_mode = #tpu.pipeline_mode<synchronous>, transform_indices = @transform_2, window_bounds = array<i64: 256, 512>}, {transform_indices = @transform_3, window_bounds = array<i64: 1, 16, 256>}, {transform_indices = @transform_4, window_bounds = array<i64: 1, 16, 128>}, {transform_indices = @transform_5, window_bounds = array<i64: 1, 16, 128>}]} {
    %c0 = arith.constant 0 : index
    %c0_0 = arith.constant 0 : index
    %c0_1 = arith.constant 0 : index
    %0 = vector.load %arg1[%c0, %c0_0, %c0_1] : memref<1x16x256xf32, #tpu.memory_space<vmem>>, vector<1x16x256xf32>
    %1 = vector.shape_cast %0 : vector<1x16x256xf32> to vector<16x256xf32>
    %c0_2 = arith.constant 0 : index
    %c0_3 = arith.constant 0 : index
    %2 = vector.load %arg2[%c0_2, %c0_3] : memref<1x256xf32, #tpu.memory_space<vmem>>, vector<1x256xf32>
    %3 = arith.mulf %1, %1 : vector<16x256xf32>
    %cst = arith.constant dense<0.000000e+00> : vector<16xf32>
    %4 = vector.multi_reduction <add>, %3, %cst [1] : vector<16x256xf32> to vector<16xf32>
    %5 = vector.shape_cast %4 : vector<16xf32> to vector<16x1xf32>
    %cst_4 = arith.constant 2.560000e+02 : f32
    %6 = vector.broadcast %cst_4 : f32 to vector<16x1xf32>
    %7 = arith.divf %5, %6 : vector<16x1xf32>
    %cst_5 = arith.constant 9.99999974E-6 : f32
    %8 = vector.broadcast %cst_5 : f32 to vector<16x1xf32>
    %9 = arith.addf %7, %8 : vector<16x1xf32>
    %10 = math.rsqrt %9 : vector<16x1xf32>
    %11 = vector.broadcast %10 : vector<16x1xf32> to vector<16x256xf32>
    %12 = arith.mulf %1, %11 : vector<16x256xf32>
    %13 = vector.broadcast %2 : vector<1x256xf32> to vector<16x256xf32>
    %14 = arith.mulf %12, %13 : vector<16x256xf32>
    %15 = arith.truncf %14 : vector<16x256xf32> to vector<16x256xbf16>
    %c0_6 = arith.constant 0 : index
    %c0_7 = arith.constant 0 : index
    %16 = vector.load %arg3[%c0_6, %c0_7] : memref<256x512xbf16, #tpu.memory_space<vmem>>, vector<256x512xbf16>
    %cst_8 = arith.constant dense<0.000000e+00> : vector<16x512xf32>
    %17 = tpu.matmul %15, %16, %cst_8 {dimension_numbers = #tpu.dot_dimension_numbers<[1], [0], [0], [1], [0, 0, 1, 1], [], []>} : vector<16x256xbf16>, vector<256x512xbf16>, vector<16x512xf32> -> vector<16x512xf32>
    %18 = vector.extract_strided_slice %17 {offsets = [0, 0], sizes = [16, 256], strides = [1, 1]} : vector<16x512xf32> to vector<16x256xf32>
    %19 = arith.truncf %18 : vector<16x256xf32> to vector<16x256xbf16>
    %c0_9 = arith.constant 0 : index
    %c0_10 = arith.constant 0 : index
    %c0_11 = arith.constant 0 : index
    %20 = vector.load %arg4[%c0_9, %c0_10, %c0_11] : memref<1x16x256xbf16, #tpu.memory_space<vmem>>, vector<1x16x256xbf16>
    %21 = vector.shape_cast %20 : vector<1x16x256xbf16> to vector<16x256xbf16>
    %22 = vector.shape_cast %19 : vector<16x256xbf16> to vector<1x16x256xbf16>
    tpu.vector_store %arg4[%c0_9, %c0_10, %c0_11], %22 {strides = array<i32>} : memref<1x16x256xbf16, #tpu.memory_space<vmem>>, vector<1x16x256xbf16>,
    %23 = vector.extract_strided_slice %17 {offsets = [0, 256], sizes = [16, 128], strides = [1, 1]} : vector<16x512xf32> to vector<16x128xf32>
    %24 = arith.truncf %23 : vector<16x128xf32> to vector<16x128xbf16>
    %c0_12 = arith.constant 0 : index
    %c0_13 = arith.constant 0 : index
    %c0_14 = arith.constant 0 : index
    %25 = vector.load %arg5[%c0_12, %c0_13, %c0_14] : memref<1x16x128xbf16, #tpu.memory_space<vmem>>, vector<1x16x128xbf16>
    %26 = vector.shape_cast %25 : vector<1x16x128xbf16> to vector<16x128xbf16>
    %27 = vector.shape_cast %24 : vector<16x128xbf16> to vector<1x16x128xbf16>
    tpu.vector_store %arg5[%c0_12, %c0_13, %c0_14], %27 {strides = array<i32>} : memref<1x16x128xbf16, #tpu.memory_space<vmem>>, vector<1x16x128xbf16>,
    %28 = vector.extract_strided_slice %17 {offsets = [0, 384], sizes = [16, 128], strides = [1, 1]} : vector<16x512xf32> to vector<16x128xf32>
    %29 = arith.truncf %28 : vector<16x128xf32> to vector<16x128xbf16>
    %c0_15 = arith.constant 0 : index
    %c0_16 = arith.constant 0 : index
    %c0_17 = arith.constant 0 : index
    %30 = vector.load %arg6[%c0_15, %c0_16, %c0_17] : memref<1x16x128xbf16, #tpu.memory_space<vmem>>, vector<1x16x128xbf16>
    %31 = vector.shape_cast %30 : vector<1x16x128xbf16> to vector<16x128xbf16>
    %32 = vector.shape_cast %29 : vector<16x128xbf16> to vector<1x16x128xbf16>
    tpu.vector_store %arg6[%c0_15, %c0_16, %c0_17], %32 {strides = array<i32>} : memref<1x16x128xbf16, #tpu.memory_space<vmem>>, vector<1x16x128xbf16>,
    return
  }
  func.func @transform_0(%arg0: i32) -> (i32, i32, i32) {
    %c0_i32 = arith.constant 0 : i32
    %c0_i32_0 = arith.constant 0 : i32
    %c0_i32_1 = arith.constant 0 : i32
    return %arg0, %c0_i32, %c0_i32_0 : i32, i32, i32
  }
  func.func @transform_1(%arg0: i32) -> (i32, i32) {
    %c0_i32 = arith.constant 0 : i32
    %c0_i32_0 = arith.constant 0 : i32
    %c0_i32_1 = arith.constant 0 : i32
    return %c0_i32, %c0_i32_0 : i32, i32
  }
  func.func @transform_2(%arg0: i32) -> (i32, i32) {
    %c0_i32 = arith.constant 0 : i32
    %c0_i32_0 = arith.constant 0 : i32
    %c0_i32_1 = arith.constant 0 : i32
    return %c0_i32, %c0_i32_0 : i32, i32
  }
  func.func @transform_3(%arg0: i32) -> (i32, i32, i32) {
    %c0_i32 = arith.constant 0 : i32
    %c0_i32_0 = arith.constant 0 : i32
    %c0_i32_1 = arith.constant 0 : i32
    return %arg0, %c0_i32, %c0_i32_0 : i32, i32, i32
  }
  func.func @transform_4(%arg0: i32) -> (i32, i32, i32) {
    %c0_i32 = arith.constant 0 : i32
    %c0_i32_0 = arith.constant 0 : i32
    %c0_i32_1 = arith.constant 0 : i32
    return %arg0, %c0_i32, %c0_i32_0 : i32, i32, i32
  }
  func.func @transform_5(%arg0: i32) -> (i32, i32, i32) {
    %c0_i32 = arith.constant 0 : i32
    %c0_i32_0 = arith.constant 0 : i32
    %c0_i32_1 = arith.constant 0 : i32
    return %arg0, %c0_i32, %c0_i32_0 : i32, i32, i32
  }
}

</mosaic_0001>

<llo_original>
// kernel: tpu_custom_call.1
$region0: #{tpu_custom_call.1}
  #allocation0 [shape = 'u32[]', space=smem, size = 0x4, offset = 0x4, fixed_abs, tag = 'smem constant byte address 0x4 - core index']
  #allocation1 [shape = 'u32[72,128]{1,0:T(1,128)}', space=vmem, size = 0x9000, scoped, tag = 'internal scratch']
  %s0 = inlined_call_operand.hbm [shape: f32[2,16,256], index: 0, kind: input, shape index: {}]
  %s1 = inlined_call_operand.hbm [shape: f32[1,256], index: 1, kind: input, shape index: {}]
  %s2 = inlined_call_operand.hbm [shape: bf16[256,512], index: 2, kind: input, shape index: {}]
  %s3 = inlined_call_operand.hbm [shape: bf16[2,16,256], index: 3, kind: output, shape index: {0}]
  %s4 = inlined_call_operand.hbm [shape: bf16[2,16,128], index: 4, kind: output, shape index: {1}]
  %s5 = inlined_call_operand.hbm [shape: bf16[2,16,128], index: 5, kind: output, shape index: {2}]
  %6 = xla_tuple %s3, %s4, %s5
  %s7 = sld [smem:[#allocation0]]
  $region73: #{tpu_custom_call.1} parent=0
    _
  %s9 = ssub.s32 1, %s7
  %s10 = scalar_select 0, %s9, %s7
  $region1: #{tpu_custom_call.1} parent=0
    #allocation2 [shape = 'u8[32768]{0}', space=vmem, size = 0x8000, scoped, tag = 'input window, operand 0']
    #allocation3 [shape = 's32[2]{0}', space=sflag, size = 0x8, scoped, tag = 'scoped memory for tpu_custom_call.1']
    #allocation4 [shape = 's32[2]{0}', space=sflag, size = 0x8, scoped, tag = 'scoped memory for tpu_custom_call.1']
    #allocation5 [shape = 'u8[1024]{0}', space=vmem, size = 0x400, scoped, tag = 'input window, operand 1, single buffered']
    #allocation6 [shape = 's32[1]{0}', space=sflag, size = 0x4, scoped, tag = 'scoped memory for tpu_custom_call.1']
    #allocation7 [shape = 'u8[262144]{0}', space=vmem, size = 0x40000, scoped, tag = 'input window, operand 2, single buffered']
    #allocation8 [shape = 'u8[16384]{0}', space=vmem, size = 0x4000, scoped, tag = 'output window, operand 0']
    #allocation9 [shape = 'u8[8192]{0}', space=vmem, size = 0x2000, scoped, tag = 'output window, operand 1']
    #allocation10 [shape = 's32[2]{0}', space=sflag, size = 0x8, scoped, tag = 'scoped memory for tpu_custom_call.1']
    #allocation11 [shape = 'u8[8192]{0}', space=vmem, size = 0x2000, scoped, tag = 'output window, operand 2']
    %11 = vsyncpa [#allocation3], 0
    %s12 = scalar_lea.sflag [#allocation3], 1
    %13 = vsyncpa %s12, 0
    %14 = vsyncpa [#allocation6], 0
    %15 = vsyncpa [#allocation4], 0
    %s16 = scalar_lea.sflag [#allocation4], 1
    %17 = vsyncpa %s16, 0
    %18 = vsyncpa [#allocation10], 0
    %s19 = scalar_lea.sflag [#allocation10], 1
    %20 = vsyncpa %s19, 0
    loop: start=0, step=1, limit=4
    $region2: #{tpu_custom_call.1} parent=1 // loop_pre_header
      _
    $region3: #{tpu_custom_call.1} parent=1 // loop_header
      %s22 = sphi 0, %s26
      %p23 = scmp.ge.s32.totalorder %s22, 4
      %s32 = sphi 0, %s34
      %s35 = sphi 0, %s32
      %s36 = sphi 0, %s35
      %s52 = sphi 0, %s36
      %s56 = sphi 0, %s56
      %s58 = sphi 0, %s56
      %s59 = sphi 0, %s58
      %s73 = sphi 0, %s59
      %s77 = sphi 0, %s77
      %s79 = sphi 0, %s77
      %s80 = sphi 0, %s79
      %s94 = sphi 0, %s80
      %s100 = sphi 0, %s102
      %s103 = sphi 0, %s100
      %s104 = sphi 0, %s103
      %s120 = sphi 0, %s104
      %s126 = sphi 0, %s128
      %s129 = sphi 0, %s126
      %s130 = sphi 0, %s129
      %s146 = sphi 0, %s130
      %s152 = sphi 0, %s154
      %s155 = sphi 0, %s152
      %s156 = sphi 0, %s155
      %s172 = sphi 0, %s156
    $region4: #{tpu_custom_call.1} parent=1 // loop_header_branch
      %25 = sbr.rel (%p23) target = $region8
    $region5: #{tpu_custom_call.1} parent=1 // loop_body
      %s27 = ssub.s32 %s22, 1
      %s28 = ssub.s32 %s22, 2
      %s29 = sadd.s32 %s22, 1
      %s30 = ssub.s32 %s22, %s29
      %p31 = scmp.eq.s32.totalorder %s30, 0
      %s33 = sadd.s32 %s32, 1
      %s34 = scalar_select %p31, %s32, %s33
      %p37 = pneg %p31
      %p38 = scmp.eq.s32.totalorder %s22, 1
      %p39 = por %p37, %p38
      %p40 = scmp.ne.s32.totalorder %s32, %s35
      %p41 = scmp.eq.s32.totalorder %s22, 0
      %p42 = por %p40, %p41
      %p43 = scmp.ne.s32.totalorder %s32, %s35
      %p44 = scmp.eq.s32.totalorder %s27, 1
      %p45 = por %p43, %p44
      %p46 = scmp.ne.s32.totalorder %s35, %s36
      %p47 = scmp.eq.s32.totalorder %s27, 0
      %p48 = por %p46, %p47
      %p49 = scmp.ne.s32.totalorder %s35, %s36
      %p50 = scmp.eq.s32.totalorder %s28, 1
      %p51 = por %p49, %p50
      %p53 = scmp.ne.s32.totalorder %s36, %s52
      %p54 = scmp.eq.s32.totalorder %s28, 0
      %p55 = por %p53, %p54
      %s57 = sadd.s32 %s56, 1
      %p60 = scmp.eq.s32.totalorder %s22, 1
      %p61 = scmp.ne.s32.totalorder %s56, %s58
      %p62 = scmp.eq.s32.totalorder %s22, 0
      %p63 = por %p61, %p62
      %p64 = scmp.ne.s32.totalorder %s56, %s58
      %p65 = scmp.eq.s32.totalorder %s27, 1
      %p66 = por %p64, %p65
      %p67 = scmp.ne.s32.totalorder %s58, %s59
      %p68 = scmp.eq.s32.totalorder %s27, 0
      %p69 = por %p67, %p68
      %p70 = scmp.ne.s32.totalorder %s58, %s59
      %p71 = scmp.eq.s32.totalorder %s28, 1
      %p72 = por %p70, %p71
      %p74 = scmp.ne.s32.totalorder %s59, %s73
      %p75 = scmp.eq.s32.totalorder %s28, 0
      %p76 = por %p74, %p75
      %s78 = sadd.s32 %s77, 1
      %p81 = scmp.eq.s32.totalorder %s22, 1
      %p82 = scmp.ne.s32.totalorder %s77, %s79
      %p83 = scmp.eq.s32.totalorder %s22, 0
      %p84 = por %p82, %p83
      %p85 = scmp.ne.s32.totalorder %s77, %s79
      %p86 = scmp.eq.s32.totalorder %s27, 1
      %p87 = por %p85, %p86
      %p88 = scmp.ne.s32.totalorder %s79, %s80
      %p89 = scmp.eq.s32.totalorder %s27, 0
      %p90 = por %p88, %p89
      %p91 = scmp.ne.s32.totalorder %s79, %s80
      %p92 = scmp.eq.s32.totalorder %s28, 1
      %p93 = por %p91, %p92
      %p95 = scmp.ne.s32.totalorder %s80, %s94
      %p96 = scmp.eq.s32.totalorder %s28, 0
      %p97 = por %p95, %p96
      %s98 = ssub.s32 %s22, %s29
      %p99 = scmp.eq.s32.totalorder %s98, 0
      %s101 = sadd.s32 %s100, 1
      %s102 = scalar_select %p99, %s100, %s101
      %p105 = pneg %p99
      %p106 = scmp.eq.s32.totalorder %s22, 1
      %p107 = por %p105, %p106
      %p108 = scmp.ne.s32.totalorder %s100, %s103
      %p109 = scmp.eq.s32.totalorder %s22, 0
      %p110 = por %p108, %p109
      %p111 = scmp.ne.s32.totalorder %s100, %s103
      %p112 = scmp.eq.s32.totalorder %s27, 1
      %p113 = por %p111, %p112
      %p114 = scmp.ne.s32.totalorder %s103, %s104
      %p115 = scmp.eq.s32.totalorder %s27, 0
      %p116 = por %p114, %p115
      %p117 = scmp.ne.s32.totalorder %s103, %s104
      %p118 = scmp.eq.s32.totalorder %s28, 1
      %p119 = por %p117, %p118
      %p121 = scmp.ne.s32.totalorder %s104, %s120
      %p122 = scmp.eq.s32.totalorder %s28, 0
      %p123 = por %p121, %p122
      %s124 = ssub.s32 %s22, %s29
      %p125 = scmp.eq.s32.totalorder %s124, 0
      %s127 = sadd.s32 %s126, 1
      %s128 = scalar_select %p125, %s126, %s127
      %p131 = pneg %p125
      %p132 = scmp.eq.s32.totalorder %s22, 1
      %p133 = por %p131, %p132
      %p134 = scmp.ne.s32.totalorder %s126, %s129
      %p135 = scmp.eq.s32.totalorder %s22, 0
      %p136 = por %p134, %p135
      %p137 = scmp.ne.s32.totalorder %s126, %s129
      %p138 = scmp.eq.s32.totalorder %s27, 1
      %p139 = por %p137, %p138
      %p140 = scmp.ne.s32.totalorder %s129, %s130
      %p141 = scmp.eq.s32.totalorder %s27, 0
      %p142 = por %p140, %p141
      %p143 = scmp.ne.s32.totalorder %s129, %s130
      %p144 = scmp.eq.s32.totalorder %s28, 1
      %p145 = por %p143, %p144
      %p147 = scmp.ne.s32.totalorder %s130, %s146
      %p148 = scmp.eq.s32.totalorder %s28, 0
      %p149 = por %p147, %p148
      %s150 = ssub.s32 %s22, %s29
      %p151 = scmp.eq.s32.totalorder %s150, 0
      %s153 = sadd.s32 %s152, 1
      %s154 = scalar_select %p151, %s152, %s153
      %p157 = pneg %p151
      %p158 = scmp.eq.s32.totalorder %s22, 1
      %p159 = por %p157, %p158
      %p160 = scmp.ne.s32.totalorder %s152, %s155
      %p161 = scmp.eq.s32.totalorder %s22, 0
      %p162 = por %p160, %p161
      %p163 = scmp.ne.s32.totalorder %s152, %s155
      %p164 = scmp.eq.s32.totalorder %s27, 1
      %p165 = por %p163, %p164
      %p166 = scmp.ne.s32.totalorder %s155, %s156
      %p167 = scmp.eq.s32.totalorder %s27, 0
      %p168 = por %p166, %p167
      %p169 = scmp.ne.s32.totalorder %s155, %s156
      %p170 = scmp.eq.s32.totalorder %s28, 1
      %p171 = por %p169, %p170
      %p173 = scmp.ne.s32.totalorder %s156, %s172
      %p174 = scmp.eq.s32.totalorder %s28, 0
      %p175 = por %p173, %p174
      %p176 = scmp.le.s32.totalorder 1, %s22
      %p177 = scmp.lt.s32.totalorder %s22, 3
      %p178 = pnand %p176, %p177
      %p179 = pneg %p178
      // Predicated region
      $region9: #{tpu_custom_call.1} parent=5 // pred_check
        _
      $region10: #{tpu_custom_call.1} parent=5 // pred_check_branch
        %181 = sbr.rel (%p178) target = $region12
      $region11: #{tpu_custom_call.1} parent=5 // pred_region
        %s182 = ssub.s32 %s22, 1
        // Predicated region
        $region13: #{tpu_custom_call.1} parent=11 // pred_check
          %p183 = pneg %p69
        $region14: #{tpu_custom_call.1} parent=11 // pred_check_branch
          %185 = sbr.rel (%p183) target = $region16
        $region15: #{tpu_custom_call.1} parent=11 // pred_region
          %187 = vsyncadd [#allocation6], 0
          %s189 = sshll.u32 %s1, 4
          %s190 = int_to_ptr.hbm [resolvable:$true] %s189
          %s191 = sshll.u32 [#allocation5], 4
          %s192 = int_to_ptr.vmem [resolvable:$true] %s191
          %194 = dma.hbm_to_vmem [thread:$0]  %s190, 32, %s192, [#allocation6]
        $region16: #{tpu_custom_call.1} parent=11 // pred_fallthru
          _
        // Predicated region
        $region17: #{tpu_custom_call.1} parent=11 // pred_check
          %p195 = pneg %p90
        $region18: #{tpu_custom_call.1} parent=11 // pred_check_branch
          %197 = sbr.rel (%p195) target = $region20
        $region19: #{tpu_custom_call.1} parent=11 // pred_region
          %199 = vsyncadd [#allocation6], 0
          %s200 = sshll.u32 %s2, 4
          %s201 = int_to_ptr.hbm [resolvable:$true] %s200
          %s202 = sshll.u32 [#allocation7], 4
          %s203 = int_to_ptr.vmem [resolvable:$true] %s202
          %208 = dma.hbm_to_vmem [thread:$0]  %s201, 8192, %s203, [#allocation6], 256, 256, 16
        $region20: #{tpu_custom_call.1} parent=11 // pred_fallthru
          _
      $region12: #{tpu_custom_call.1} parent=5 // pred_fallthru
        _
      %p209 = scmp.lt.s32.totalorder %s22, 2
      // Predicated region
      $region21: #{tpu_custom_call.1} parent=5 // pred_check
        %p210 = pneg %p209
      $region22: #{tpu_custom_call.1} parent=5 // pred_check_branch
        %212 = sbr.rel (%p210) target = $region24
      $region23: #{tpu_custom_call.1} parent=5 // pred_region
        // Predicated region
        $region25: #{tpu_custom_call.1} parent=23 // pred_check
          %p213 = pneg %p42
        $region26: #{tpu_custom_call.1} parent=23 // pred_check_branch
          %215 = sbr.rel (%p213) target = $region28
        $region27: #{tpu_custom_call.1} parent=23 // pred_region
          %s216 = sand.u32 %s32, 1
          %s217 = scalar_lea.sflag [#allocation3], %s216
          %s218 = sand.u32 %s32, 1
          %s219 = smul.addr %s218, 32
          %s220 = scalar_lea.vmem [#allocation2], %s219
          %222 = vsyncadd %s217, 0
          %s223 = smul.addr %s22, 4
          %s224 = smul.addr %s223, 8
          %s225 = scalar_lea.hbm %s0, %s224
          %s226 = sshll.u32 %s225, 4
          %s227 = int_to_ptr.hbm [resolvable:$true] %s226
          %s228 = sshll.u32 %s220, 4
          %s229 = int_to_ptr.vmem [resolvable:$true] %s228
          %234 = dma.hbm_to_vmem [thread:$0]  %s227, 512, %s229, %s217, 256, 256, 16
        $region28: #{tpu_custom_call.1} parent=23 // pred_fallthru
          _
      $region24: #{tpu_custom_call.1} parent=5 // pred_fallthru
        _
      %p235 = scmp.le.s32.totalorder 1, %s22
      %p236 = scmp.lt.s32.totalorder %s22, 3
      %p237 = pnand %p235, %p236
      %p238 = pneg %p237
      // Predicated region
      $region29: #{tpu_custom_call.1} parent=5 // pred_check
        _
      $region30: #{tpu_custom_call.1} parent=5 // pred_check_branch
        %240 = sbr.rel (%p237) target = $region32
      $region31: #{tpu_custom_call.1} parent=5 // pred_region
        %s241 = ssub.s32 %s22, 1
        %s242 = sand.u32 %s35, 1
        %s243 = scalar_lea.sflag [#allocation3], %s242
        %s244 = sand.u32 %s35, 1
        %s245 = smul.addr %s244, 32
        %s246 = scalar_lea.vmem [#allocation2], %s245
        // Predicated region
        $region33: #{tpu_custom_call.1} parent=31 // pred_check
          %p247 = pneg %p48
        $region34: #{tpu_custom_call.1} parent=31 // pred_check_branch
          %249 = sbr.rel (%p247) target = $region36
        $region35: #{tpu_custom_call.1} parent=31 // pred_region
          %251 = dma.done %s243, 512
        $region36: #{tpu_custom_call.1} parent=31 // pred_fallthru
          _
        // Predicated region
        $region37: #{tpu_custom_call.1} parent=31 // pred_check
          %p252 = pneg %p69
        $region38: #{tpu_custom_call.1} parent=31 // pred_check_branch
          %254 = sbr.rel (%p252) target = $region40
        $region39: #{tpu_custom_call.1} parent=31 // pred_region
          %256 = dma.done [#allocation6], 32
        $region40: #{tpu_custom_call.1} parent=31 // pred_fallthru
          _
        // Predicated region
        $region41: #{tpu_custom_call.1} parent=31 // pred_check
          %p257 = pneg %p90
        $region42: #{tpu_custom_call.1} parent=31 // pred_check_branch
          %259 = sbr.rel (%p257) target = $region44
        $region43: #{tpu_custom_call.1} parent=31 // pred_region
          %261 = dma.done [#allocation6], 8192
        $region44: #{tpu_custom_call.1} parent=31 // pred_fallthru
          _
        %s262 = sand.u32 %s35, 1
        %s263 = scalar_lea.sflag [#allocation3], %s262
        %s264 = sand.u32 %s35, 1
        %s265 = smul.addr %s264, 32
        %s266 = scalar_lea.vmem [#allocation2], %s265
        %p267 = pneg %p48
        %p268 = pneg %p45
        %p269 = pneg %p69
        %p270 = pneg %p66
        %p271 = pneg %p90
        %p272 = pneg %p87
        %p273 = pneg %p116
        %p274 = pneg %p113
        %s275 = sand.u32 %s103, 1
        %s276 = scalar_lea.sflag [#allocation4], %s275
        %s277 = sand.u32 %s103, 1
        %s278 = smul.addr %s277, 16
        %s279 = scalar_lea.vmem [#allocation8], %s278
        %p280 = pneg %p142
        %p281 = pneg %p139
        %s282 = sand.u32 %s27, 1
        %s283 = scalar_lea.sflag [#allocation10], %s282
        %s284 = sand.u32 %s129, 1
        %s285 = smul.addr %s284, 8
        %s286 = scalar_lea.vmem [#allocation9], %s285
        %p287 = pneg %p168
        %p288 = pneg %p165
        %s289 = sand.u32 %s27, 1
        %s290 = scalar_lea.sflag [#allocation10], %s289
        %s291 = sand.u32 %s155, 1
        %s292 = smul.addr %s291, 8
        %s293 = scalar_lea.vmem [#allocation11], %s292
        %v294 = vld [vmem:[%s246] sm:$0xff]
        %v295 = vld [vmem:[%s246 + $0x8] sm:$0xff]
        %v296 = vld [vmem:[%s246 + $0x10] sm:$0xff]
        %v297 = vld [vmem:[%s246 + $0x18] sm:$0xff]
        %v298 = vld [vmem:[#allocation5] sm:$0x3]
        %v299 = vmul.f32 %v294, %v294
        %v300 = vmul.f32 %v295, %v295
        %v301 = vmul.f32 %v296, %v296
        %v302 = vmul.f32 %v297, %v297
        %v303 = vadd.f32 %v299, %v300
        %304 = vadd.xlane.f32.xlu0 %v303
        %v305 = vpop.xlane.xlu0 %304
        %v306 = vadd.f32 %v301, %v302
        %307 = vadd.xlane.f32.xlu0 %v306
        %v308 = vpop.xlane.xlu0 %307
        %v309 = vrcp.pop 256.0
        %v310 = vmul.f32 256.0, %v309
        %v311 = vsub.f32 1.0, %v310
        %v312 = vmul.f32 %v309, %v311
        %v313 = vadd.f32 %v309, %v312
        %vm314 = vweird.f32 %v309
        %v315 = vsel %vm314, %v309, %v313
        %v316 = vmul.f32 %v305, %v315
        %v317 = vmul.f32 %v308, %v315
        %v318 = vadd.f32 %v316, 1e-05
        %v319 = vadd.f32 %v317, 1e-05
        %v320 = vrsqrt.pop %v318
        %v321 = vmul.f32 %v320, %v318
        %v322 = vmul.f32 %v321, %v320
        %v323 = vmul.f32 0.5, %v322
        %v324 = vsub.f32 1.5, %v323
        %v325 = vmul.f32 %v320, %v324
        %vm326 = vweird.f32 %v318
        %vm327 = vweird.f32 %v320
        %vm328 = vmor %vm326, %vm327
        %v329 = vsel %vm328, %v320, %v325
        %v330 = vrsqrt.pop %v319
        %v331 = vmul.f32 %v330, %v319
        %v332 = vmul.f32 %v331, %v330
        %v333 = vmul.f32 0.5, %v332
        %v334 = vsub.f32 1.5, %v333
        %v335 = vmul.f32 %v330, %v334
        %vm336 = vweird.f32 %v319
        %vm337 = vweird.f32 %v330
        %vm338 = vmor %vm336, %vm337
        %v339 = vsel %vm338, %v330, %v335
        %v340 = vmul.f32 %v294, %v329
        %v341 = vmul.f32 %v295, %v329
        %v342 = vmul.f32 %v296, %v339
        %v343 = vmul.f32 %v297, %v339
        %v345 = vperm.slane %v298, 0
        %v346 = vperm.slane %v298, 1
        %v349 = vmul.f32 %v340, %v345
        %v350 = vmul.f32 %v341, %v346
        %v351 = vmul.f32 %v342, %v345
        %v352 = vmul.f32 %v343, %v346
        %v353 = vpack.c.bf16 %v351, %v349
        %v354 = vpack.c.bf16 %v352, %v350
        %v355 = vld [vmem:[#allocation7] sm:$0xff]
        %v356 = vld [vmem:[#allocation7 + $0x8] sm:$0xff]
        %v357 = vld [vmem:[#allocation7 + $0x10] sm:$0xff]
        %v358 = vld [vmem:[#allocation7 + $0x18] sm:$0xff]
        %v359 = vld [vmem:[#allocation7 + $0x20] sm:$0xff]
        %v360 = vld [vmem:[#allocation7 + $0x28] sm:$0xff]
        %v361 = vld [vmem:[#allocation7 + $0x30] sm:$0xff]
        %v362 = vld [vmem:[#allocation7 + $0x38] sm:$0xff]
        %v363 = vld [vmem:[#allocation7 + $0x40] sm:$0xff]
        %v364 = vld [vmem:[#allocation7 + $0x48] sm:$0xff]
        %v365 = vld [vmem:[#allocation7 + $0x50] sm:$0xff]
        %v366 = vld [vmem:[#allocation7 + $0x58] sm:$0xff]
        %v367 = vld [vmem:[#allocation7 + $0x60] sm:$0xff]
        %v368 = vld [vmem:[#allocation7 + $0x68] sm:$0xff]
        %v369 = vld [vmem:[#allocation7 + $0x70] sm:$0xff]
        %v370 = vld [vmem:[#allocation7 + $0x78] sm:$0xff]
        %v371 = vld [vmem:[#allocation7 + $0x80] sm:$0xff]
        %v372 = vld [vmem:[#allocation7 + $0x88] sm:$0xff]
        %v373 = vld [vmem:[#allocation7 + $0x90] sm:$0xff]
        %v374 = vld [vmem:[#allocation7 + $0x98] sm:$0xff]
        %v375 = vld [vmem:[#allocation7 + $0xa0] sm:$0xff]
        %v376 = vld [vmem:[#allocation7 + $0xa8] sm:$0xff]
        %v377 = vld [vmem:[#allocation7 + $0xb0] sm:$0xff]
        %v378 = vld [vmem:[#allocation7 + $0xb8] sm:$0xff]
        %v379 = vld [vmem:[#allocation7 + $0xc0] sm:$0xff]
        %v380 = vld [vmem:[#allocation7 + $0xc8] sm:$0xff]
        %v381 = vld [vmem:[#allocation7 + $0xd0] sm:$0xff]
        %v382 = vld [vmem:[#allocation7 + $0xd8] sm:$0xff]
        %v383 = vld [vmem:[#allocation7 + $0xe0] sm:$0xff]
        %v384 = vld [vmem:[#allocation7 + $0xe8] sm:$0xff]
        %v385 = vld [vmem:[#allocation7 + $0xf0] sm:$0xff]
        %v386 = vld [vmem:[#allocation7 + $0xf8] sm:$0xff]
        %v387 = vld [vmem:[#allocation7 + $0x100] sm:$0xff]
        %v388 = vld [vmem:[#allocation7 + $0x108] sm:$0xff]
        %v389 = vld [vmem:[#allocation7 + $0x110] sm:$0xff]
        %v390 = vld [vmem:[#allocation7 + $0x118] sm:$0xff]
        %v391 = vld [vmem:[#allocation7 + $0x120] sm:$0xff]
        %v392 = vld [vmem:[#allocation7 + $0x128] sm:$0xff]
        %v393 = vld [vmem:[#allocation7 + $0x130] sm:$0xff]
        %v394 = vld [vmem:[#allocation7 + $0x138] sm:$0xff]
        %v395 = vld [vmem:[#allocation7 + $0x140] sm:$0xff]
        %v396 = vld [vmem:[#allocation7 + $0x148] sm:$0xff]
        %v397 = vld [vmem:[#allocation7 + $0x150] sm:$0xff]
        %v398 = vld [vmem:[#allocation7 + $0x158] sm:$0xff]
        %v399 = vld [vmem:[#allocation7 + $0x160] sm:$0xff]
        %v400 = vld [vmem:[#allocation7 + $0x168] sm:$0xff]
        %v401 = vld [vmem:[#allocation7 + $0x170] sm:$0xff]
        %v402 = vld [vmem:[#allocation7 + $0x178] sm:$0xff]
        %v403 = vld [vmem:[#allocation7 + $0x180] sm:$0xff]
        %v404 = vld [vmem:[#allocation7 + $0x188] sm:$0xff]
        %v405 = vld [vmem:[#allocation7 + $0x190] sm:$0xff]
        %v406 = vld [vmem:[#allocation7 + $0x198] sm:$0xff]
        %v407 = vld [vmem:[#allocation7 + $0x1a0] sm:$0xff]
        %v408 = vld [vmem:[#allocation7 + $0x1a8] sm:$0xff]
        %v409 = vld [vmem:[#allocation7 + $0x1b0] sm:$0xff]
        %v410 = vld [vmem:[#allocation7 + $0x1b8] sm:$0xff]
        %v411 = vld [vmem:[#allocation7 + $0x1c0] sm:$0xff]
        %v412 = vld [vmem:[#allocation7 + $0x1c8] sm:$0xff]
        %v413 = vld [vmem:[#allocation7 + $0x1d0] sm:$0xff]
        %v414 = vld [vmem:[#allocation7 + $0x1d8] sm:$0xff]
        %v415 = vld [vmem:[#allocation7 + $0x1e0] sm:$0xff]
        %v416 = vld [vmem:[#allocation7 + $0x1e8] sm:$0xff]
        %v417 = vld [vmem:[#allocation7 + $0x1f0] sm:$0xff]
        %v418 = vld [vmem:[#allocation7 + $0x1f8] sm:$0xff]
        %v483 = vunpack.c.l.b16 %v355
        %v484 = vunpack.c.h.b16 %v355
        %v485 = vunpack.c.l.b16 %v356
        %v486 = vunpack.c.h.b16 %v356
        %v487 = vunpack.c.l.b16 %v357
        %v488 = vunpack.c.h.b16 %v357
        %v489 = vunpack.c.l.b16 %v358
        %v490 = vunpack.c.h.b16 %v358
        %v491 = vunpack.c.l.b16 %v359
        %v492 = vunpack.c.h.b16 %v359
        %v493 = vunpack.c.l.b16 %v360
        %v494 = vunpack.c.h.b16 %v360
        %v495 = vunpack.c.l.b16 %v361
        %v496 = vunpack.c.h.b16 %v361
        %v497 = vunpack.c.l.b16 %v362
        %v498 = vunpack.c.h.b16 %v362
        %v499 = vunpack.c.l.b16 %v363
        %v500 = vunpack.c.h.b16 %v363
        %v501 = vunpack.c.l.b16 %v364
        %v502 = vunpack.c.h.b16 %v364
        %v503 = vunpack.c.l.b16 %v365
        %v504 = vunpack.c.h.b16 %v365
        %v505 = vunpack.c.l.b16 %v366
        %v506 = vunpack.c.h.b16 %v366
        %v507 = vunpack.c.l.b16 %v367
        %v508 = vunpack.c.h.b16 %v367
        %v509 = vunpack.c.l.b16 %v368
        %v510 = vunpack.c.h.b16 %v368
        %v511 = vunpack.c.l.b16 %v369
        %v512 = vunpack.c.h.b16 %v369
        %v513 = vunpack.c.l.b16 %v370
        %v514 = vunpack.c.h.b16 %v370
        %v515 = vunpack.c.l.b16 %v371
        %v516 = vunpack.c.h.b16 %v371
        %v517 = vunpack.c.l.b16 %v372
        %v518 = vunpack.c.h.b16 %v372
        %v519 = vunpack.c.l.b16 %v373
        %v520 = vunpack.c.h.b16 %v373
        %v521 = vunpack.c.l.b16 %v374
        %v522 = vunpack.c.h.b16 %v374
        %v523 = vunpack.c.l.b16 %v375
        %v524 = vunpack.c.h.b16 %v375
        %v525 = vunpack.c.l.b16 %v376
        %v526 = vunpack.c.h.b16 %v376
        %v527 = vunpack.c.l.b16 %v377
        %v528 = vunpack.c.h.b16 %v377
        %v529 = vunpack.c.l.b16 %v378
        %v530 = vunpack.c.h.b16 %v378
        %v531 = vunpack.c.l.b16 %v379
        %v532 = vunpack.c.h.b16 %v379
        %v533 = vunpack.c.l.b16 %v380
        %v534 = vunpack.c.h.b16 %v380
        %v535 = vunpack.c.l.b16 %v381
        %v536 = vunpack.c.h.b16 %v381
        %v537 = vunpack.c.l.b16 %v382
        %v538 = vunpack.c.h.b16 %v382
        %v539 = vunpack.c.l.b16 %v383
        %v540 = vunpack.c.h.b16 %v383
        %v541 = vunpack.c.l.b16 %v384
        %v542 = vunpack.c.h.b16 %v384
        %v543 = vunpack.c.l.b16 %v385
        %v544 = vunpack.c.h.b16 %v385
        %v545 = vunpack.c.l.b16 %v386
        %v546 = vunpack.c.h.b16 %v386
        %v547 = vunpack.c.l.b16 %v387
        %v548 = vunpack.c.h.b16 %v387
        %v549 = vunpack.c.l.b16 %v388
        %v550 = vunpack.c.h.b16 %v388
        %v551 = vunpack.c.l.b16 %v389
        %v552 = vunpack.c.h.b16 %v389
        %v553 = vunpack.c.l.b16 %v390
        %v554 = vunpack.c.h.b16 %v390
        %v555 = vunpack.c.l.b16 %v391
        %v556 = vunpack.c.h.b16 %v391
        %v557 = vunpack.c.l.b16 %v392
        %v558 = vunpack.c.h.b16 %v392
        %v559 = vunpack.c.l.b16 %v393
        %v560 = vunpack.c.h.b16 %v393
        %v561 = vunpack.c.l.b16 %v394
        %v562 = vunpack.c.h.b16 %v394
        %v563 = vunpack.c.l.b16 %v395
        %v564 = vunpack.c.h.b16 %v395
        %v565 = vunpack.c.l.b16 %v396
        %v566 = vunpack.c.h.b16 %v396
        %v567 = vunpack.c.l.b16 %v397
        %v568 = vunpack.c.h.b16 %v397
        %v569 = vunpack.c.l.b16 %v398
        %v570 = vunpack.c.h.b16 %v398
        %v571 = vunpack.c.l.b16 %v399
        %v572 = vunpack.c.h.b16 %v399
        %v573 = vunpack.c.l.b16 %v400
        %v574 = vunpack.c.h.b16 %v400
        %v575 = vunpack.c.l.b16 %v401
        %v576 = vunpack.c.h.b16 %v401
        %v577 = vunpack.c.l.b16 %v402
        %v578 = vunpack.c.h.b16 %v402
        %v579 = vunpack.c.l.b16 %v403
        %v580 = vunpack.c.h.b16 %v403
        %v581 = vunpack.c.l.b16 %v404
        %v582 = vunpack.c.h.b16 %v404
        %v583 = vunpack.c.l.b16 %v405
        %v584 = vunpack.c.h.b16 %v405
        %v585 = vunpack.c.l.b16 %v406
        %v586 = vunpack.c.h.b16 %v406
        %v587 = vunpack.c.l.b16 %v407
        %v588 = vunpack.c.h.b16 %v407
        %v589 = vunpack.c.l.b16 %v408
        %v590 = vunpack.c.h.b16 %v408
        %v591 = vunpack.c.l.b16 %v409
        %v592 = vunpack.c.h.b16 %v409
        %v593 = vunpack.c.l.b16 %v410
        %v594 = vunpack.c.h.b16 %v410
        %v595 = vunpack.c.l.b16 %v411
        %v596 = vunpack.c.h.b16 %v411
        %v597 = vunpack.c.l.b16 %v412
        %v598 = vunpack.c.h.b16 %v412
        %v599 = vunpack.c.l.b16 %v413
        %v600 = vunpack.c.h.b16 %v413
        %v601 = vunpack.c.l.b16 %v414
        %v602 = vunpack.c.h.b16 %v414
        %v603 = vunpack.c.l.b16 %v415
        %v604 = vunpack.c.h.b16 %v415
        %v605 = vunpack.c.l.b16 %v416
        %v606 = vunpack.c.h.b16 %v416
        %v607 = vunpack.c.l.b16 %v417
        %v608 = vunpack.c.h.b16 %v417
        %v609 = vunpack.c.l.b16 %v418
        %v610 = vunpack.c.h.b16 %v418
        %v611 = vpack.c.b16 %v487, %v483
        %v612 = vpack.c.b16 %v488, %v484
        %v613 = vpack.c.b16 %v489, %v485
        %v614 = vpack.c.b16 %v490, %v486
        %v615 = vpack.c.b16 %v495, %v491
        %v616 = vpack.c.b16 %v496, %v492
        %v617 = vpack.c.b16 %v497, %v493
        %v618 = vpack.c.b16 %v498, %v494
        %v619 = vpack.c.b16 %v503, %v499
        %v620 = vpack.c.b16 %v504, %v500
        %v621 = vpack.c.b16 %v505, %v501
        %v622 = vpack.c.b16 %v506, %v502
        %v623 = vpack.c.b16 %v511, %v507
        %v624 = vpack.c.b16 %v512, %v508
        %v625 = vpack.c.b16 %v513, %v509
        %v626 = vpack.c.b16 %v514, %v510
        %v627 = vpack.c.b16 %v519, %v515
        %v628 = vpack.c.b16 %v520, %v516
        %v629 = vpack.c.b16 %v521, %v517
        %v630 = vpack.c.b16 %v522, %v518
        %v631 = vpack.c.b16 %v527, %v523
        %v632 = vpack.c.b16 %v528, %v524
        %v633 = vpack.c.b16 %v529, %v525
        %v634 = vpack.c.b16 %v530, %v526
        %v635 = vpack.c.b16 %v535, %v531
        %v636 = vpack.c.b16 %v536, %v532
        %v637 = vpack.c.b16 %v537, %v533
        %v638 = vpack.c.b16 %v538, %v534
        %v639 = vpack.c.b16 %v543, %v539
        %v640 = vpack.c.b16 %v544, %v540
        %v641 = vpack.c.b16 %v545, %v541
        %v642 = vpack.c.b16 %v546, %v542
        %v643 = vpack.c.b16 %v551, %v547
        %v644 = vpack.c.b16 %v552, %v548
        %v645 = vpack.c.b16 %v553, %v549
        %v646 = vpack.c.b16 %v554, %v550
        %v647 = vpack.c.b16 %v559, %v555
        %v648 = vpack.c.b16 %v560, %v556
        %v649 = vpack.c.b16 %v561, %v557
        %v650 = vpack.c.b16 %v562, %v558
        %v651 = vpack.c.b16 %v567, %v563
        %v652 = vpack.c.b16 %v568, %v564
        %v653 = vpack.c.b16 %v569, %v565
        %v654 = vpack.c.b16 %v570, %v566
        %v655 = vpack.c.b16 %v575, %v571
        %v656 = vpack.c.b16 %v576, %v572
        %v657 = vpack.c.b16 %v577, %v573
        %v658 = vpack.c.b16 %v578, %v574
        %v659 = vpack.c.b16 %v583, %v579
        %v660 = vpack.c.b16 %v584, %v580
        %v661 = vpack.c.b16 %v585, %v581
        %v662 = vpack.c.b16 %v586, %v582
        %v663 = vpack.c.b16 %v591, %v587
        %v664 = vpack.c.b16 %v592, %v588
        %v665 = vpack.c.b16 %v593, %v589
        %v666 = vpack.c.b16 %v594, %v590
        %v667 = vpack.c.b16 %v599, %v595
        %v668 = vpack.c.b16 %v600, %v596
        %v669 = vpack.c.b16 %v601, %v597
        %v670 = vpack.c.b16 %v602, %v598
        %v671 = vpack.c.b16 %v607, %v603
        %v672 = vpack.c.b16 %v608, %v604
        %v673 = vpack.c.b16 %v609, %v605
        %v674 = vpack.c.b16 %v610, %v606
        %739 = vmatpush.bf16.msra.mxu0 %v639
        %740 = vmatpush.bf16.msra.mxu0 %v635
        %741 = vmatpush.bf16.msra.mxu0 %v631
        %742 = vmatpush.bf16.msra.mxu0 %v627
        %743 = vmatpush.bf16.msra.mxu0 %v623
        %744 = vmatpush.bf16.msra.mxu0 %v619
        %745 = vmatpush.bf16.msra.mxu0 %v615
        %746 = vmatpush.bf16.msra.mxu0 %v611
        %747 = vmatmul.bf16.gmra.mxu0 %v353
        %v748 = vpop.f32.mrf.mxu0
        %v749 = vadd.f32 0.0, %v748
        %v750 = vpop.f32.mrf.mxu0
        %v751 = vadd.f32 0.0, %v750
        %752 = vdwg.mxu0
        %753 = vmatpush.bf16.msra.mxu0 %v671
        %754 = vmatpush.bf16.msra.mxu0 %v667
        %755 = vmatpush.bf16.msra.mxu0 %v663
        %756 = vmatpush.bf16.msra.mxu0 %v659
        %757 = vmatpush.bf16.msra.mxu0 %v655
        %758 = vmatpush.bf16.msra.mxu0 %v651
        %759 = vmatpush.bf16.msra.mxu0 %v647
        %760 = vmatpush.bf16.msra.mxu0 %v643
        %761 = vmatmul.bf16.gmra.mxu0 %v354
        %v762 = vpop.f32.mrf.mxu0
        %v763 = vadd.f32 %v749, %v762
        %v764 = vpop.f32.mrf.mxu0
        %v765 = vadd.f32 %v751, %v764
        %766 = vdwg.mxu0
        %767 = vmatpush.bf16.msra.mxu0 %v640
        %768 = vmatpush.bf16.msra.mxu0 %v636
        %769 = vmatpush.bf16.msra.mxu0 %v632
        %770 = vmatpush.bf16.msra.mxu0 %v628
        %771 = vmatpush.bf16.msra.mxu0 %v624
        %772 = vmatpush.bf16.msra.mxu0 %v620
        %773 = vmatpush.bf16.msra.mxu0 %v616
        %774 = vmatpush.bf16.msra.mxu0 %v612
        %775 = vmatmul.bf16.gmra.mxu0 %v353
        %v776 = vpop.f32.mrf.mxu0
        %v777 = vadd.f32 0.0, %v776
        %v778 = vpop.f32.mrf.mxu0
        %v779 = vadd.f32 0.0, %v778
        %780 = vdwg.mxu0
        %781 = vmatpush.bf16.msra.mxu0 %v672
        %782 = vmatpush.bf16.msra.mxu0 %v668
        %783 = vmatpush.bf16.msra.mxu0 %v664
        %784 = vmatpush.bf16.msra.mxu0 %v660
        %785 = vmatpush.bf16.msra.mxu0 %v656
        %786 = vmatpush.bf16.msra.mxu0 %v652
        %787 = vmatpush.bf16.msra.mxu0 %v648
        %788 = vmatpush.bf16.msra.mxu0 %v644
        %789 = vmatmul.bf16.gmra.mxu0 %v354
        %v790 = vpop.f32.mrf.mxu0
        %v791 = vadd.f32 %v777, %v790
        %v792 = vpop.f32.mrf.mxu0
        %v793 = vadd.f32 %v779, %v792
        %794 = vdwg.mxu0
        %795 = vmatpush.bf16.msra.mxu0 %v641
        %796 = vmatpush.bf16.msra.mxu0 %v637
        %797 = vmatpush.bf16.msra.mxu0 %v633
        %798 = vmatpush.bf16.msra.mxu0 %v629
        %799 = vmatpush.bf16.msra.mxu0 %v625
        %800 = vmatpush.bf16.msra.mxu0 %v621
        %801 = vmatpush.bf16.msra.mxu0 %v617
        %802 = vmatpush.bf16.msra.mxu0 %v613
        %803 = vmatmul.bf16.gmra.mxu0 %v353
        %v804 = vpop.f32.mrf.mxu0
        %v805 = vadd.f32 0.0, %v804
        %v806 = vpop.f32.mrf.mxu0
        %v807 = vadd.f32 0.0, %v806
        %808 = vdwg.mxu0
        %809 = vmatpush.bf16.msra.mxu0 %v673
        %810 = vmatpush.bf16.msra.mxu0 %v669
        %811 = vmatpush.bf16.msra.mxu0 %v665
        %812 = vmatpush.bf16.msra.mxu0 %v661
        %813 = vmatpush.bf16.msra.mxu0 %v657
        %814 = vmatpush.bf16.msra.mxu0 %v653
        %815 = vmatpush.bf16.msra.mxu0 %v649
        %816 = vmatpush.bf16.msra.mxu0 %v645
        %817 = vmatmul.bf16.gmra.mxu0 %v354
        %v818 = vpop.f32.mrf.mxu0
        %v819 = vadd.f32 %v805, %v818
        %v820 = vpop.f32.mrf.mxu0
        %v821 = vadd.f32 %v807, %v820
        %822 = vdwg.mxu0
        %823 = vmatpush.bf16.msra.mxu0 %v642
        %824 = vmatpush.bf16.msra.mxu0 %v638
        %825 = vmatpush.bf16.msra.mxu0 %v634
        %826 = vmatpush.bf16.msra.mxu0 %v630
        %827 = vmatpush.bf16.msra.mxu0 %v626
        %828 = vmatpush.bf16.msra.mxu0 %v622
        %829 = vmatpush.bf16.msra.mxu0 %v618
        %830 = vmatpush.bf16.msra.mxu0 %v614
        %831 = vmatmul.bf16.gmra.mxu0 %v353
        %v832 = vpop.f32.mrf.mxu0
        %v833 = vadd.f32 0.0, %v832
        %v834 = vpop.f32.mrf.mxu0
        %v835 = vadd.f32 0.0, %v834
        %836 = vdwg.mxu0
        %837 = vmatpush.bf16.msra.mxu0 %v674
        %838 = vmatpush.bf16.msra.mxu0 %v670
        %839 = vmatpush.bf16.msra.mxu0 %v666
        %840 = vmatpush.bf16.msra.mxu0 %v662
        %841 = vmatpush.bf16.msra.mxu0 %v658
        %842 = vmatpush.bf16.msra.mxu0 %v654
        %843 = vmatpush.bf16.msra.mxu0 %v650
        %844 = vmatpush.bf16.msra.mxu0 %v646
        %845 = vmatmul.bf16.gmra.mxu0 %v354
        %v846 = vpop.f32.mrf.mxu0
        %v847 = vadd.f32 %v833, %v846
        %v848 = vpop.f32.mrf.mxu0
        %v849 = vadd.f32 %v835, %v848
        %850 = vdwg.mxu0
        %v851 = vpack.c.bf16 %v791, %v763
        %v852 = vpack.c.bf16 %v793, %v765
        %853 = vst [vmem:[%s279] sm:$0xff] %v851
        %854 = vst [vmem:[%s279 + $0x8] sm:$0xff] %v852
        %v855 = vpack.c.bf16 %v819, %v819
        %v856 = vpack.c.bf16 %v821, %v821
        %857 = vst [vmem:[%s286] sm:$0xf] %v855
        %858 = vst [vmem:[%s286 + $0x4] sm:$0xf] %v856
        %v859 = vpack.c.bf16 %v847, %v847
        %v860 = vpack.c.bf16 %v849, %v849
        %861 = vst [vmem:[%s293] sm:$0xf] %v859
        %862 = vst [vmem:[%s293 + $0x4] sm:$0xf] %v860
        %s863 = sand.u32 %s103, 1
        %s864 = scalar_lea.sflag [#allocation4], %s863
        %s865 = sand.u32 %s103, 1
        %s866 = smul.addr %s865, 16
        %s867 = scalar_lea.vmem [#allocation8], %s866
        %s868 = sand.u32 %s27, 1
        %s869 = scalar_lea.sflag [#allocation10], %s868
        %s870 = sand.u32 %s129, 1
        %s871 = smul.addr %s870, 8
        %s872 = scalar_lea.vmem [#allocation9], %s871
        %s873 = sand.u32 %s27, 1
        %s874 = scalar_lea.sflag [#allocation10], %s873
        %s875 = sand.u32 %s155, 1
        %s876 = smul.addr %s875, 8
        %s877 = scalar_lea.vmem [#allocation11], %s876
        // Predicated region
        $region45: #{tpu_custom_call.1} parent=31 // pred_check
          %p878 = pneg %p113
        $region46: #{tpu_custom_call.1} parent=31 // pred_check_branch
          %880 = sbr.rel (%p878) target = $region48
        $region47: #{tpu_custom_call.1} parent=31 // pred_region
          %882 = vsyncadd %s864, 0
          %s883 = smul.addr %s27, 4
          %s884 = smul.addr %s883, 4
          %s885 = scalar_lea.hbm %s3, %s884
          %s886 = sshll.u32 %s867, 4
          %s887 = int_to_ptr.vmem [resolvable:$true] %s886
          %s888 = sshll.u32 %s885, 4
          %s889 = int_to_ptr.hbm [resolvable:$true] %s888
          %894 = dma.vmem_to_hbm [thread:$0]  %s887, 256, %s889, %s864, 128, 128, 8
        $region48: #{tpu_custom_call.1} parent=31 // pred_fallthru
          _
        // Predicated region
        $region49: #{tpu_custom_call.1} parent=31 // pred_check
          %p895 = pneg %p139
        $region50: #{tpu_custom_call.1} parent=31 // pred_check_branch
          %897 = sbr.rel (%p895) target = $region52
        $region51: #{tpu_custom_call.1} parent=31 // pred_region
          %899 = vsyncadd %s869, 0
          %s900 = smul.addr %s27, 2
          %s901 = smul.addr %s900, 4
          %s902 = scalar_lea.hbm %s4, %s901
          %s903 = sshll.u32 %s872, 4
          %s904 = int_to_ptr.vmem [resolvable:$true] %s903
          %s905 = sshll.u32 %s902, 4
          %s906 = int_to_ptr.hbm [resolvable:$true] %s905
          %911 = dma.vmem_to_hbm [thread:$0]  %s904, 128, %s906, %s869, 64, 64, 4
        $region52: #{tpu_custom_call.1} parent=31 // pred_fallthru
          _
        // Predicated region
        $region53: #{tpu_custom_call.1} parent=31 // pred_check
          %p912 = pneg %p165
        $region54: #{tpu_custom_call.1} parent=31 // pred_check_branch
          %914 = sbr.rel (%p912) target = $region56
        $region55: #{tpu_custom_call.1} parent=31 // pred_region
          %916 = vsyncadd %s874, 0
          %s917 = smul.addr %s27, 2
          %s918 = smul.addr %s917, 4
          %s919 = scalar_lea.hbm %s5, %s918
          %s920 = sshll.u32 %s877, 4
          %s921 = int_to_ptr.vmem [resolvable:$true] %s920
          %s922 = sshll.u32 %s919, 4
          %s923 = int_to_ptr.hbm [resolvable:$true] %s922
          %928 = dma.vmem_to_hbm [thread:$0]  %s921, 128, %s923, %s874, 64, 64, 4
        $region56: #{tpu_custom_call.1} parent=31 // pred_fallthru
          _
      $region32: #{tpu_custom_call.1} parent=5 // pred_fallthru
        _
      %p929 = scmp.le.s32.totalorder 2, %s22
      // Predicated region
      $region57: #{tpu_custom_call.1} parent=5 // pred_check
        %p930 = pneg %p929
      $region58: #{tpu_custom_call.1} parent=5 // pred_check_branch
        %932 = sbr.rel (%p930) target = $region60
      $region59: #{tpu_custom_call.1} parent=5 // pred_region
        %s933 = ssub.s32 %s22, 2
        // Predicated region
        $region61: #{tpu_custom_call.1} parent=59 // pred_check
          %p934 = pneg %p119
        $region62: #{tpu_custom_call.1} parent=59 // pred_check_branch
          %936 = sbr.rel (%p934) target = $region64
        $region63: #{tpu_custom_call.1} parent=59 // pred_region
          %s937 = sand.u32 %s104, 1
          %s938 = scalar_lea.sflag [#allocation4], %s937
          %s939 = sand.u32 %s104, 1
          %s940 = smul.addr %s939, 16
          %s941 = scalar_lea.vmem [#allocation8], %s940
          %943 = dma.done %s938, 256
        $region64: #{tpu_custom_call.1} parent=59 // pred_fallthru
          _
        // Predicated region
        $region65: #{tpu_custom_call.1} parent=59 // pred_check
          %p944 = pneg %p145
        $region66: #{tpu_custom_call.1} parent=59 // pred_check_branch
          %946 = sbr.rel (%p944) target = $region68
        $region67: #{tpu_custom_call.1} parent=59 // pred_region
          %s947 = sand.u32 %s28, 1
          %s948 = scalar_lea.sflag [#allocation10], %s947
          %s949 = sand.u32 %s130, 1
          %s950 = smul.addr %s949, 8
          %s951 = scalar_lea.vmem [#allocation9], %s950
          %953 = dma.done %s948, 128
        $region68: #{tpu_custom_call.1} parent=59 // pred_fallthru
          _
        // Predicated region
        $region69: #{tpu_custom_call.1} parent=59 // pred_check
          %p954 = pneg %p171
        $region70: #{tpu_custom_call.1} parent=59 // pred_check_branch
          %956 = sbr.rel (%p954) target = $region72
        $region71: #{tpu_custom_call.1} parent=59 // pred_region
          %s957 = sand.u32 %s28, 1
          %s958 = scalar_lea.sflag [#allocation10], %s957
          %s959 = sand.u32 %s156, 1
          %s960 = smul.addr %s959, 8
          %s961 = scalar_lea.vmem [#allocation11], %s960
          %963 = dma.done %s958, 128
        $region72: #{tpu_custom_call.1} parent=59 // pred_fallthru
          _
      $region60: #{tpu_custom_call.1} parent=5 // pred_fallthru
        _
    $region6: #{tpu_custom_call.1} parent=1 // loop_footer
      %s26 = sadd.s32 1, %s22
    $region7: #{tpu_custom_call.1} parent=1 // loop_footer_branch
      %21 = sbr.rel target = $region3
    $region8: #{tpu_custom_call.1} parent=1 // loop_exit
      _
    %964 = vsyncpa [#allocation3], 1
    %s965 = scalar_lea.sflag [#allocation3], 1
    %966 = vsyncpa %s965, 1
    %967 = vsyncpa [#allocation6], 1
    %968 = vsyncpa [#allocation4], 1
    %s969 = scalar_lea.sflag [#allocation4], 1
    %970 = vsyncpa %s969, 1
    %971 = vsyncpa [#allocation10], 1
    %s972 = scalar_lea.sflag [#allocation10], 1
    %973 = vsyncpa %s972, 1

</llo_original>
